<compile_context>
chip_gen: v7x
topology: tpu7x:2x2x1
jax: 0.10.0
libtpu: 0.0.40
codegen_flags: <defaults>
</compile_context>

<pallas_src>
import jax
import jax.numpy as jnp
from jax.experimental import pallas as pl
from jax.experimental.pallas import tpu as pltpu

GT = 64      # tokens fused per row: 64 tok x 4 feat = 256 in-lanes, 64 x 2 = 128 out-lanes
D_IN = 4
D_OUT = 2


def _attn_kernel(w_ref, b_ref, x_ref, o_ref):
    # w_ref: VMEM [256, 128] block-diagonal folded weights (resident across grid)
    # b_ref: VMEM [1, 128]   tiled folded bias (resident)
    # x_ref: VMEM [TR, 256]  TR fused rows (= TR*64 tokens), natural x layout
    # o_ref: VMEM [TR, 128]  natural flat [*, 2] output layout, dense 128-lane stores
    acc = jnp.dot(x_ref[...].astype(jnp.float32), w_ref[...],
                  preferred_element_type=jnp.float32)
    o_ref[...] = (acc + b_ref[...]).astype(o_ref.dtype)


def my_attention(x, wq, bq, wo, bo, *, tile_rows=8192):
    """x: [B, S, 4]; wq: [4,4] (out,in); bq: [4]; wo: [2,4] (out,in); bo: [2]."""
    B, S, d_in = x.shape
    d_out = wo.shape[0]
    M = B * S
    hi = jax.lax.Precision.HIGHEST

    # ---- Fold the two linears into one exact affine map (f32, full precision). ----
    wq_f = wq.astype(jnp.float32)
    wo_f = wo.astype(jnp.float32)
    wc = jnp.dot(wq_f.T, wo_f.T, precision=hi)                       # [4, 2]
    bc = jnp.dot(bq.astype(jnp.float32), wo_f.T, precision=hi) \
        + bo.astype(jnp.float32)                                     # [2]

    # ---- Lift to the natural-layout fused-row map (block-diagonal kron). ----
    w_big = jnp.kron(jnp.eye(GT, dtype=jnp.float32), wc)             # [256, 128]
    b_big = jnp.tile(bc, GT).reshape(1, GT * d_out)                  # [1, 128]

    row_elems = GT * d_in                                            # 256
    n_elems = M * d_in
    pad_elems = (-n_elems) % row_elems
    x_flat = x.reshape(-1)                                           # free reshape
    if pad_elems:
        # Only hit when M % 64 != 0 (e.g. this tiny demo); one small pad pass.
        x_flat = jnp.pad(x_flat, (0, pad_elems))
    R = x_flat.shape[0] // row_elems
    x2 = x_flat.reshape(R, row_elems)                                # free reshape

    TR = min(tile_rows, R)          # full-extent block if R is small, else 8192 (mult of 8)
    grid = (pl.cdiv(R, TR),)        # boundary blocks are clipped; no padding of the R axis

    y2 = pl.pallas_call(
        _attn_kernel,
        out_shape=jax.ShapeDtypeStruct((R, GT * d_out), x.dtype),
        grid=grid,
        in_specs=[
            pl.BlockSpec((row_elems, GT * d_out), lambda i: (0, 0)),  # W_big (resident)
            pl.BlockSpec((1, GT * d_out), lambda i: (0, 0)),          # b_big (resident)
            pl.BlockSpec((TR, row_elems), lambda i: (i, 0)),          # x rows
        ],
        out_specs=pl.BlockSpec((TR, GT * d_out), lambda i: (i, 0)),
        compiler_params=pltpu.CompilerParams(
            dimension_semantics=("parallel",),
            vmem_limit_bytes=48 * 1024 * 1024,
        ),
    )(w_big, b_big, x2)

    y_flat = y2.reshape(-1)                                          # free reshape
    if pad_elems:
        y_flat = y_flat[: M * d_out]
    return y_flat.reshape(B, S, d_out)


def _torch_like_linear_init(key, out_features, in_features, dtype=jnp.float32):
    # Deterministic init mimicking nn.Linear default: U(-1/sqrt(in), 1/sqrt(in)).
    kw, kb = jax.random.split(key)
    bound = 1.0 / (in_features ** 0.5)
    w = jax.random.uniform(kw, (out_features, in_features), dtype,
                           minval=-bound, maxval=bound)
    b = jax.random.uniform(kb, (out_features,), dtype,
                           minval=-bound, maxval=bound)
    return w, b


if __name__ == "__main__":
    key = jax.random.PRNGKey(0)
    k_x, k_q, k_o = jax.random.split(key, 3)

    # Small shapes consistent with the module: features = 4.
    B, S = 2, 8
    x = jax.random.normal(k_x, (B, S, D_IN), dtype=jnp.float32)

    wq, bq = _torch_like_linear_init(k_q, 4, 4)   # q_proj: Linear(4, 4)
    wo, bo = _torch_like_linear_init(k_o, 2, 4)   # out_proj: Linear(4, 2)

    z = my_attention(x, wq, bq, wo, bo)
    jax.block_until_ready(z)

    # Pure-JAX reference (two-matmul formulation, full f32 precision).
    hi = jax.lax.Precision.HIGHEST
    ref = jnp.dot(jnp.dot(x, wq.T, precision=hi) + bq, wo.T, precision=hi) + bo
    assert z.shape == (B, S, D_OUT), z.shape
    assert jnp.allclose(z, ref, atol=1e-4, rtol=1e-4), "mismatch vs reference"

    print("KERNEL_OK")
</pallas_src>

<mosaic_0001>
module attributes {stable_mosaic.version = 11 : i64} {
  func.func @_attn_kernel(%arg0: i32, %arg1: memref<256x128xf32, #tpu.memory_space<vmem>>, %arg2: memref<1x128xf32, #tpu.memory_space<vmem>>, %arg3: memref<1x256xf32, #tpu.memory_space<vmem>>, %arg4: memref<1x128xf32, #tpu.memory_space<vmem>>) attributes {dimension_semantics = [#tpu.dimension_semantics<parallel>], iteration_bounds = array<i64: 1>, scalar_prefetch = 0 : i64, scratch_operands = 0 : i64, tpu.core_type = #tpu.core_type<tc>, window_params = [{pipeline_mode = #tpu.pipeline_mode<synchronous>, transform_indices = @transform_0, window_bounds = array<i64: 256, 128>}, {pipeline_mode = #tpu.pipeline_mode<synchronous>, transform_indices = @transform_1, window_bounds = array<i64: 1, 128>}, {transform_indices = @transform_2, window_bounds = array<i64: 1, 256>}, {transform_indices = @transform_3, window_bounds = array<i64: 1, 128>}]} {
    %c0 = arith.constant 0 : index
    %c0_0 = arith.constant 0 : index
    %0 = vector.load %arg3[%c0, %c0_0] : memref<1x256xf32, #tpu.memory_space<vmem>>, vector<1x256xf32>
    %c0_1 = arith.constant 0 : index
    %c0_2 = arith.constant 0 : index
    %1 = vector.load %arg1[%c0_1, %c0_2] : memref<256x128xf32, #tpu.memory_space<vmem>>, vector<256x128xf32>
    %cst = arith.constant dense<0.000000e+00> : vector<1x128xf32>
    %2 = tpu.matmul %0, %1, %cst {dimension_numbers = #tpu.dot_dimension_numbers<[1], [0], [0], [1], [0, 0, 1, 1], [], []>} : vector<1x256xf32>, vector<256x128xf32>, vector<1x128xf32> -> vector<1x128xf32>
    %c0_3 = arith.constant 0 : index
    %c0_4 = arith.constant 0 : index
    %3 = vector.load %arg2[%c0_3, %c0_4] : memref<1x128xf32, #tpu.memory_space<vmem>>, vector<1x128xf32>
    %4 = arith.addf %2, %3 : vector<1x128xf32>
    %c0_5 = arith.constant 0 : index
    %c0_6 = arith.constant 0 : index
    %5 = vector.load %arg4[%c0_5, %c0_6] : memref<1x128xf32, #tpu.memory_space<vmem>>, vector<1x128xf32>
    tpu.vector_store %arg4[%c0_5, %c0_6], %4 {strides = array<i32>} : memref<1x128xf32, #tpu.memory_space<vmem>>, vector<1x128xf32>,
    return
  }
  func.func @transform_0(%arg0: i32) -> (i32, i32) {
    %c0_i32 = arith.constant 0 : i32
    %c0_i32_0 = arith.constant 0 : i32
    %c0_i32_1 = arith.constant 0 : i32
    return %c0_i32, %c0_i32_0 : i32, i32
  }
  func.func @transform_1(%arg0: i32) -> (i32, i32) {
    %c0_i32 = arith.constant 0 : i32
    %c0_i32_0 = arith.constant 0 : i32
    %c0_i32_1 = arith.constant 0 : i32
    return %c0_i32, %c0_i32_0 : i32, i32
  }
  func.func @transform_2(%arg0: i32) -> (i32, i32) {
    %c0_i32 = arith.constant 0 : i32
    %c0_i32_0 = arith.constant 0 : i32
    return %arg0, %c0_i32 : i32, i32
  }
  func.func @transform_3(%arg0: i32) -> (i32, i32) {
    %c0_i32 = arith.constant 0 : i32
    %c0_i32_0 = arith.constant 0 : i32
    return %arg0, %c0_i32 : i32, i32
  }
}

</mosaic_0001>

<llo_original>
// kernel: tpu_custom_call.1
$region0: #{tpu_custom_call.1}
  #allocation0 [shape = 'u32[]', space=smem, size = 0x4, offset = 0x4, fixed_abs, tag = 'smem constant byte address 0x4 - core index']
  #allocation1 [shape = 'u32[144,128]{1,0:T(1,128)}', space=vmem, size = 0x12000, scoped, tag = 'internal scratch']
  %s0 = inlined_call_operand.hbm [shape: f32[256,128], index: 0, kind: input, shape index: {}]
  %s1 = inlined_call_operand.vmem [shape: f32[1,128], index: 1, kind: input, shape index: {}]
  %s2 = inlined_call_operand.vmem [shape: f32[1,256], index: 2, kind: input, shape index: {}]
  %s3 = inlined_call_operand.hbm [shape: f32[1,128], index: 3, kind: output, shape index: {}]
  %s4 = sld [smem:[#allocation0]]
  $region26: #{tpu_custom_call.1} parent=0
    _
  %s6 = ssub.s32 1, %s4
  %s7 = scalar_select 0, %s6, %s4
  $region1: #{tpu_custom_call.1} parent=0
    #allocation2 [shape = 'u8[131072]{0}', space=vmem, size = 0x20000, scoped, tag = 'input window, operand 0, single buffered']
    #allocation3 [shape = 's32[1]{0}', space=sflag, size = 0x4, scoped, tag = 'scoped memory for tpu_custom_call.1']
    #allocation4 [shape = 's32[1]{0}', space=sflag, size = 0x4, scoped, tag = 'scoped memory for tpu_custom_call.1']
    #allocation5 [shape = 'u8[512]{0}', space=vmem, size = 0x400, scoped, tag = 'output window, operand 0, single buffered']
    %8 = vsyncpa [#allocation3], 0
    %9 = vsyncpa [#allocation4], 0
    // Predicated region
    $region2: #{tpu_custom_call.1} parent=1 // pred_check
      _
    $region3: #{tpu_custom_call.1} parent=1 // pred_check_branch
      %11 = sbr.rel (0) target = $region5
    $region4: #{tpu_custom_call.1} parent=1 // pred_region
      %s13 = ssub.s32 4096, 4096
      %14 = vsyncadd [#allocation3], %s13
      %s15 = sshll.u32 [#allocation2], 4
      %s16 = int_to_ptr.vmem [resolvable:$true] %s15
      %21 = dma.hbm_to_vmem [thread:$0]  %s0, 4096, %s16, [#allocation3], 128, 128, 8
    $region5: #{tpu_custom_call.1} parent=1 // pred_fallthru
      _
    // Predicated region
    $region6: #{tpu_custom_call.1} parent=1 // pred_check
      _
    $region7: #{tpu_custom_call.1} parent=1 // pred_check_branch
      %23 = sbr.rel (0) target = $region9
    $region8: #{tpu_custom_call.1} parent=1 // pred_region
      _
    $region9: #{tpu_custom_call.1} parent=1 // pred_fallthru
      _
    // Predicated region
    $region10: #{tpu_custom_call.1} parent=1 // pred_check
      _
    $region11: #{tpu_custom_call.1} parent=1 // pred_check_branch
      %25 = sbr.rel (0) target = $region13
    $region12: #{tpu_custom_call.1} parent=1 // pred_region
      _
    $region13: #{tpu_custom_call.1} parent=1 // pred_fallthru
      _
    // Predicated region
    $region14: #{tpu_custom_call.1} parent=1 // pred_check
      _
    $region15: #{tpu_custom_call.1} parent=1 // pred_check_branch
      %27 = sbr.rel (0) target = $region17
    $region16: #{tpu_custom_call.1} parent=1 // pred_region
      %28 = dma.done [#allocation3], 4096
    $region17: #{tpu_custom_call.1} parent=1 // pred_fallthru
      _
    %v29 = vld [vmem:[%s2] sm:$0x3]
    %v30 = vld [vmem:[#allocation2] sm:$0xff]
    %v31 = vld [vmem:[#allocation2 + $0x8] sm:$0xff]
    %v32 = vld [vmem:[#allocation2 + $0x10] sm:$0xff]
    %v33 = vld [vmem:[#allocation2 + $0x18] sm:$0xff]
    %v34 = vld [vmem:[#allocation2 + $0x20] sm:$0xff]
    %v35 = vld [vmem:[#allocation2 + $0x28] sm:$0xff]
    %v36 = vld [vmem:[#allocation2 + $0x30] sm:$0xff]
    %v37 = vld [vmem:[#allocation2 + $0x38] sm:$0xff]
    %v38 = vld [vmem:[#allocation2 + $0x40] sm:$0xff]
    %v39 = vld [vmem:[#allocation2 + $0x48] sm:$0xff]
    %v40 = vld [vmem:[#allocation2 + $0x50] sm:$0xff]
    %v41 = vld [vmem:[#allocation2 + $0x58] sm:$0xff]
    %v42 = vld [vmem:[#allocation2 + $0x60] sm:$0xff]
    %v43 = vld [vmem:[#allocation2 + $0x68] sm:$0xff]
    %v44 = vld [vmem:[#allocation2 + $0x70] sm:$0xff]
    %v45 = vld [vmem:[#allocation2 + $0x78] sm:$0xff]
    %v46 = vld [vmem:[#allocation2 + $0x80] sm:$0xff]
    %v47 = vld [vmem:[#allocation2 + $0x88] sm:$0xff]
    %v48 = vld [vmem:[#allocation2 + $0x90] sm:$0xff]
    %v49 = vld [vmem:[#allocation2 + $0x98] sm:$0xff]
    %v50 = vld [vmem:[#allocation2 + $0xa0] sm:$0xff]
    %v51 = vld [vmem:[#allocation2 + $0xa8] sm:$0xff]
    %v52 = vld [vmem:[#allocation2 + $0xb0] sm:$0xff]
    %v53 = vld [vmem:[#allocation2 + $0xb8] sm:$0xff]
    %v54 = vld [vmem:[#allocation2 + $0xc0] sm:$0xff]
    %v55 = vld [vmem:[#allocation2 + $0xc8] sm:$0xff]
    %v56 = vld [vmem:[#allocation2 + $0xd0] sm:$0xff]
    %v57 = vld [vmem:[#allocation2 + $0xd8] sm:$0xff]
    %v58 = vld [vmem:[#allocation2 + $0xe0] sm:$0xff]
    %v59 = vld [vmem:[#allocation2 + $0xe8] sm:$0xff]
    %v60 = vld [vmem:[#allocation2 + $0xf0] sm:$0xff]
    %v61 = vld [vmem:[#allocation2 + $0xf8] sm:$0xff]
    %v62 = vld [vmem:[%s1] sm:$0x1]
    %v64 = vlaneseq
    %v65 = vshrl.u32 %v64, 7
    %v66 = vsub.s32 0, %v65
    %v67 = vrot.slane %v29, %v66
    %v68 = vlaneseq
    %v69 = vshrl.u32 %v68, 7
    %v70 = vsub.s32 1, %v69
    %v71 = vrot.slane %v29, %v70
    %74 = vmatprep.subr.mxu0 0.0
    %75 = vmatpush1.msra.mxu0 %v30
    %76 = vmatprep.subr.mxu0 0.0
    %77 = vmatpush1.msra.mxu0 %v31
    %78 = vmatprep.subr.mxu0 0.0
    %79 = vmatpush1.msra.mxu0 %v32
    %80 = vmatprep.subr.mxu0 0.0
    %81 = vmatpush1.msra.mxu0 %v33
    %82 = vmatprep.subr.mxu0 0.0
    %83 = vmatpush1.msra.mxu0 %v34
    %84 = vmatprep.subr.mxu0 0.0
    %85 = vmatpush1.msra.mxu0 %v35
    %86 = vmatprep.subr.mxu0 0.0
    %87 = vmatpush1.msra.mxu0 %v36
    %88 = vmatprep.subr.mxu0 0.0
    %89 = vmatpush1.msra.mxu0 %v37
    %90 = vmatprep.subr.mxu0 0.0
    %91 = vmatpush1.msra.mxu0 %v38
    %92 = vmatprep.subr.mxu0 0.0
    %93 = vmatpush1.msra.mxu0 %v39
    %94 = vmatprep.subr.mxu0 0.0
    %95 = vmatpush1.msra.mxu0 %v40
    %96 = vmatprep.subr.mxu0 0.0
    %97 = vmatpush1.msra.mxu0 %v41
    %98 = vmatprep.subr.mxu0 0.0
    %99 = vmatpush1.msra.mxu0 %v42
    %100 = vmatprep.subr.mxu0 0.0
    %101 = vmatpush1.msra.mxu0 %v43
    %102 = vmatprep.subr.mxu0 0.0
    %103 = vmatpush1.msra.mxu0 %v44
    %104 = vmatprep.subr.mxu0 0.0
    %105 = vmatpush1.msra.mxu0 %v45
    %106 = vmatprep.subr.mxu0 0.0
    %107 = vmatpush1.msra.mxu0 %v46
    %108 = vmatprep.subr.mxu0 0.0
    %109 = vmatpush1.msra.mxu0 %v47
    %110 = vmatprep.subr.mxu0 0.0
    %111 = vmatpush1.msra.mxu0 %v48
    %112 = vmatprep.subr.mxu0 0.0
    %113 = vmatpush1.msra.mxu0 %v49
    %114 = vmatprep.subr.mxu0 0.0
    %115 = vmatpush1.msra.mxu0 %v50
    %116 = vmatprep.subr.mxu0 0.0
    %117 = vmatpush1.msra.mxu0 %v51
    %118 = vmatprep.subr.mxu0 0.0
    %119 = vmatpush1.msra.mxu0 %v52
    %120 = vmatprep.subr.mxu0 0.0
    %121 = vmatpush1.msra.mxu0 %v53
    %122 = vmatprep.subr.mxu0 0.0
    %123 = vmatpush1.msra.mxu0 %v54
    %124 = vmatprep.subr.mxu0 0.0
    %125 = vmatpush1.msra.mxu0 %v55
    %126 = vmatprep.subr.mxu0 0.0
    %127 = vmatpush1.msra.mxu0 %v56
    %128 = vmatprep.subr.mxu0 0.0
    %129 = vmatpush1.msra.mxu0 %v57
    %130 = vmatprep.subr.mxu0 0.0
    %131 = vmatpush1.msra.mxu0 %v58
    %132 = vmatprep.subr.mxu0 0.0
    %133 = vmatpush1.msra.mxu0 %v59
    %134 = vmatprep.subr.mxu0 0.0
    %135 = vmatpush1.msra.mxu0 %v60
    %136 = vmatprep.subr.mxu0 0.0
    %137 = vmatpush1.msra.mxu0 %v61
    %138 = vmatprep.mubr.f32.mxu0 %v71
    %139 = vmatmul.mubr.f32.gmra.mrb[0].mxu0 %v67
    %v140 = vpop.f32.mrb[0].mxu0
    %v141 = vadd.f32 %v62, %v140
    %v142 = vpop.f32.mrb[0].mxu0
    %143 = vdwg.mxu0
    %144 = vst [vmem:[#allocation5] sm:$0x1] %v141
    // Predicated region
    $region18: #{tpu_custom_call.1} parent=1 // pred_check
      _
    $region19: #{tpu_custom_call.1} parent=1 // pred_check_branch
      %146 = sbr.rel (0) target = $region21
    $region20: #{tpu_custom_call.1} parent=1 // pred_region
      %s148 = ssub.s32 16, 16
      %149 = vsyncadd [#allocation4], %s148
      %s151 = sshll.u32 [#allocation5], 4
      %s152 = int_to_ptr.vmem [resolvable:$true] %s151
      %154 = dma.vmem_to_hbm [thread:$0]  %s152, 16, %s3, [#allocation4]
    $region21: #{tpu_custom_call.1} parent=1 // pred_fallthru
      _
    // Predicated region
    $region22: #{tpu_custom_call.1} parent=1 // pred_check
      _
    $region23: #{tpu_custom_call.1} parent=1 // pred_check_branch
      %156 = sbr.rel (0) target = $region25
    $region24: #{tpu_custom_call.1} parent=1 // pred_region
      %157 = dma.done [#allocation4], 16
    $region25: #{tpu_custom_call.1} parent=1 // pred_fallthru
      _
    %158 = vsyncpa [#allocation3], 1
    %159 = vsyncpa [#allocation4], 1

</llo_original>
